<compile_context>
chip_gen: v6e
topology: v6e:2x2x1
jax: 0.10.0
libtpu: 0.0.40
codegen_flags: <defaults>
</compile_context>

<pallas_src>
import functools

import jax
import jax.numpy as jnp
from jax import lax
from jax.experimental import pallas as pl
from jax.experimental.pallas import tpu as pltpu


def _round_up(v, m):
    return ((v + m - 1) // m) * m


def _pick_tile_d(d_padded, cap=512):
    """Largest multiple-of-128 divisor of d_padded that is <= cap."""
    t = max(128, min(cap, d_padded))
    t = (t // 128) * 128
    while d_padded % t:
        t -= 128
    return t


def _avg_pool_kernel(idx_ref, x_ref, o_ref, cnt_ref, *acc_scratch, acc_in_out):
    # The accumulator is the resident output block itself when out dtype is f32.
    acc_ref = o_ref if acc_in_out else acc_scratch[0]
    k = pl.program_id(1)                     # reduction axis (last, "arbitrary")

    @pl.when(k == 0)
    def _():
        acc_ref[...] = jnp.zeros_like(acc_ref)
        cnt_ref[...] = jnp.zeros_like(cnt_ref)

    idx = idx_ref[...]                        # (tile_n, 1) int32; -1 for padding
    tile_n = idx.shape[0]
    dst_p = o_ref.shape[0]

    # one-hot[i, j] = (dst_idx[i] == j); padded rows (idx == -1) never match.
    match = lax.broadcasted_iota(jnp.int32, (tile_n, dst_p), 1) == idx
    onehot = match.astype(x_ref.dtype)        # keep MXU inputs in x's dtype

    # scatter-add == onehot^T @ x, accumulated in f32 on the MXU.
    acc_ref[...] += lax.dot_general(
        onehot, x_ref[...], (((0,), (0,)), ((), ())),
        preferred_element_type=jnp.float32).astype(acc_ref.dtype)

    # per-destination counts, lane-dense (1, dst_p); no transpose in hot loop.
    cnt_ref[...] += jnp.sum(match.astype(jnp.float32), axis=0, keepdims=True)

    @pl.when(k == pl.num_programs(1) - 1)
    def _():
        # One reciprocal per destination row, one transpose, broadcast multiply.
        # approx=False keeps numerics within ~1 ulp of the reference division.
        inv = pl.reciprocal(cnt_ref[...] + 1e-8, approx=False)   # (1, dst_p)
        o_ref[...] = (acc_ref[...].astype(jnp.float32) * inv.T).astype(o_ref.dtype)


def average_pooling(x, dst_idx, dst_size, *, tile_n=256, tile_d_cap=512):
    """Segment-mean pooling matching the PyTorch AveragePooling module.

    x:        [N, D] float array
    dst_idx:  [N] integer destination index for each source row
    dst_size: static python int, number of destination rows
    returns:  [dst_size, D] array of per-destination means (0 for empty rows)
    """
    N, D = x.shape
    assert dst_size >= 1
    out_dtype = x.dtype

    # ---- pad to TPU-friendly shapes ----------------------------------------
    tile_n = _round_up(max(tile_n, 16), 16)      # >= bf16 sublane minimum
    n_p = _round_up(max(N, 1), tile_n)
    d_p = _round_up(D, 128)
    tile_d = _pick_tile_d(d_p, tile_d_cap)
    dst_p = _round_up(dst_size, 128)             # lane dim of the one-hot
    # TODO(synk): for very large dst_size, add a dst tile axis instead of a
    # single (dst_p, tile_d) resident accumulator.

    x_p = jnp.pad(x, ((0, n_p - N), (0, d_p - D)))
    idx_p = jnp.pad(dst_idx.astype(jnp.int32), (0, n_p - N),
                    constant_values=-1).reshape(n_p, 1)

    acc_in_out = (out_dtype == jnp.float32)
    scratch = [pltpu.VMEM((1, dst_p), jnp.float32)]               # counts
    if not acc_in_out:
        scratch.append(pltpu.VMEM((dst_p, tile_d), jnp.float32))  # f32 accumulator

    kernel = functools.partial(_avg_pool_kernel, acc_in_out=acc_in_out)

    out_p = pl.pallas_call(
        kernel,
        out_shape=jax.ShapeDtypeStruct((dst_p, d_p), out_dtype),
        grid_spec=pltpu.PrefetchScalarGridSpec(
            num_scalar_prefetch=0,
            grid=(d_p // tile_d, n_p // tile_n),   # (parallel D, arbitrary N)
            in_specs=[
                pl.BlockSpec((tile_n, 1), lambda j, k: (k, 0)),       # dst_idx
                pl.BlockSpec((tile_n, tile_d), lambda j, k: (k, j)),  # x
            ],
            out_specs=pl.BlockSpec((dst_p, tile_d), lambda j, k: (0, j)),
            scratch_shapes=scratch,
        ),
        compiler_params=pltpu.CompilerParams(
            dimension_semantics=("parallel", "arbitrary")),
    )(idx_p, x_p)

    return out_p[:dst_size, :D]


def _reference(x, dst_idx, dst_size):
    out = jnp.zeros((dst_size,) + x.shape[1:], x.dtype).at[dst_idx].add(x)
    nmr = jnp.zeros((dst_size,) + x.shape[1:], x.dtype).at[dst_idx].add(
        jnp.ones_like(x))
    return out / (nmr + 1e-8)


if __name__ == "__main__":
    key = jax.random.PRNGKey(0)

    # Small case (matches the module's intended usage shapes).
    k1, k2 = jax.random.split(key)
    N, D, dst_size = 16, 32, 8
    x = jax.random.normal(k1, (N, D), dtype=jnp.float32)
    dst_idx = jax.random.randint(k2, (N,), 0, dst_size, dtype=jnp.int32)

    out = jax.block_until_ready(average_pooling(x, dst_idx, dst_size))
    ref = _reference(x, dst_idx, dst_size)
    assert out.shape == (dst_size, D)
    assert jnp.allclose(out, ref, atol=1e-5, rtol=1e-5), (
        f"max abs err {jnp.max(jnp.abs(out - ref))}")

    # Larger case exercising both grid axes (2 reduction tiles x 5 feature tiles).
    k3, k4 = jax.random.split(k1)
    N2, D2, dst2 = 512, 640, 40
    x2 = jax.random.normal(k3, (N2, D2), dtype=jnp.float32)
    idx2 = jax.random.randint(k4, (N2,), 0, dst2, dtype=jnp.int32)

    out2 = jax.block_until_ready(average_pooling(x2, idx2, dst2))
    ref2 = _reference(x2, idx2, dst2)
    assert jnp.allclose(out2, ref2, atol=1e-4, rtol=1e-4), (
        f"max abs err {jnp.max(jnp.abs(out2 - ref2))}")

    print("KERNEL_OK")
</pallas_src>

<mosaic_0001>
module attributes {stable_mosaic.version = 11 : i64} {
  func.func @_avg_pool_kernel(%arg0: i32, %arg1: i32, %arg2: memref<256x1xi32, #tpu.memory_space<vmem>>, %arg3: memref<256x128xf32, #tpu.memory_space<vmem>>, %arg4: memref<128x128xf32, #tpu.memory_space<vmem>>, %arg5: memref<1x128xf32, #tpu.memory_space<vmem>>) attributes {dimension_semantics = [#tpu.dimension_semantics<parallel>, #tpu.dimension_semantics<arbitrary>], iteration_bounds = array<i64: 1, 1>, scalar_prefetch = 0 : i64, scratch_operands = 1 : i64, tpu.core_type = #tpu.core_type<tc>, window_params = [{transform_indices = @transform_0, window_bounds = array<i64: 256, 1>}, {transform_indices = @transform_1, window_bounds = array<i64: 256, 128>}, {transform_indices = @transform_2, window_bounds = array<i64: 128, 128>}]} {
    %c0_i32 = arith.constant 0 : i32
    %0 = arith.cmpi eq, %arg1, %c0_i32 : i32
    %1 = arith.extui %0 : i1 to i32
    %c0_i32_0 = arith.constant 0 : i32
    %2 = arith.cmpi ne, %1, %c0_i32_0 : i32
    scf.if %2 {
      %cst_15 = arith.constant 0.000000e+00 : f32
      %24 = vector.broadcast %cst_15 : f32 to vector<128x128xf32>
      %c0_16 = arith.constant 0 : index
      %c0_17 = arith.constant 0 : index
      %25 = vector.load %arg4[%c0_16, %c0_17] : memref<128x128xf32, #tpu.memory_space<vmem>>, vector<128x128xf32>
      tpu.vector_store %arg4[%c0_16, %c0_17], %24 {strides = array<i32>} : memref<128x128xf32, #tpu.memory_space<vmem>>, vector<128x128xf32>,
      %cst_18 = arith.constant 0.000000e+00 : f32
      %26 = vector.broadcast %cst_18 : f32 to vector<1x128xf32>
      %c0_19 = arith.constant 0 : index
      %c0_20 = arith.constant 0 : index
      %27 = vector.load %arg5[%c0_19, %c0_20] : memref<1x128xf32, #tpu.memory_space<vmem>>, vector<1x128xf32>
      tpu.vector_store %arg5[%c0_19, %c0_20], %26 {strides = array<i32>} : memref<1x128xf32, #tpu.memory_space<vmem>>, vector<1x128xf32>,
    } else {
    }
    %c0 = arith.constant 0 : index
    %c0_1 = arith.constant 0 : index
    %3 = vector.load %arg2[%c0, %c0_1] : memref<256x1xi32, #tpu.memory_space<vmem>>, vector<256x1xi32>
    %4 = tpu.iota {dimensions = array<i32: 1>} : vector<256x128xi32>
    %5 = vector.broadcast %3 : vector<256x1xi32> to vector<256x128xi32>
    %6 = arith.cmpi eq, %4, %5 : vector<256x128xi32>
    %7 = arith.extui %6 : vector<256x128xi1> to vector<256x128xi32>
    %8 = arith.sitofp %7 : vector<256x128xi32> to vector<256x128xf32>
    %c0_2 = arith.constant 0 : index
    %c0_3 = arith.constant 0 : index
    %9 = vector.load %arg4[%c0_2, %c0_3] : memref<128x128xf32, #tpu.memory_space<vmem>>, vector<128x128xf32>
    %c0_4 = arith.constant 0 : index
    %c0_5 = arith.constant 0 : index
    %10 = vector.load %arg3[%c0_4, %c0_5] : memref<256x128xf32, #tpu.memory_space<vmem>>, vector<256x128xf32>
    %cst = arith.constant dense<0.000000e+00> : vector<128x128xf32>
    %11 = tpu.matmul %8, %10, %cst {dimension_numbers = #tpu.dot_dimension_numbers<[0], [0], [1], [1], [0, 1, 1, 1], [], []>} : vector<256x128xf32>, vector<256x128xf32>, vector<128x128xf32> -> vector<128x128xf32>
    %12 = arith.addf %9, %11 : vector<128x128xf32>
    %c0_6 = arith.constant 0 : index
    %c0_7 = arith.constant 0 : index
    %13 = vector.load %arg4[%c0_6, %c0_7] : memref<128x128xf32, #tpu.memory_space<vmem>>, vector<128x128xf32>
    tpu.vector_store %arg4[%c0_6, %c0_7], %12 {strides = array<i32>} : memref<128x128xf32, #tpu.memory_space<vmem>>, vector<128x128xf32>,
    %c0_8 = arith.constant 0 : index
    %c0_9 = arith.constant 0 : index
    %14 = vector.load %arg5[%c0_8, %c0_9] : memref<1x128xf32, #tpu.memory_space<vmem>>, vector<1x128xf32>
    %15 = arith.extui %6 : vector<256x128xi1> to vector<256x128xi32>
    %16 = arith.sitofp %15 : vector<256x128xi32> to vector<256x128xf32>
    %cst_10 = arith.constant dense<0.000000e+00> : vector<128xf32>
    %17 = vector.multi_reduction <add>, %16, %cst_10 [0] : vector<256x128xf32> to vector<128xf32>
    %18 = vector.shape_cast %17 : vector<128xf32> to vector<1x128xf32>
    %19 = arith.addf %14, %18 : vector<1x128xf32>
    %c0_11 = arith.constant 0 : index
    %c0_12 = arith.constant 0 : index
    %20 = vector.load %arg5[%c0_11, %c0_12] : memref<1x128xf32, #tpu.memory_space<vmem>>, vector<1x128xf32>
    tpu.vector_store %arg5[%c0_11, %c0_12], %19 {strides = array<i32>} : memref<1x128xf32, #tpu.memory_space<vmem>>, vector<1x128xf32>,
    %c0_i32_13 = arith.constant 0 : i32
    %21 = arith.cmpi eq, %arg1, %c0_i32_13 : i32
    %22 = arith.extui %21 : i1 to i32
    %c0_i32_14 = arith.constant 0 : i32
    %23 = arith.cmpi ne, %22, %c0_i32_14 : i32
    scf.if %23 {
      %c0_15 = arith.constant 0 : index
      %c0_16 = arith.constant 0 : index
      %24 = vector.load %arg5[%c0_15, %c0_16] : memref<1x128xf32, #tpu.memory_space<vmem>>, vector<1x128xf32>
      %cst_17 = arith.constant 9.99999993E-9 : f32
      %25 = vector.broadcast %cst_17 : f32 to vector<1x128xf32>
      %26 = arith.addf %24, %25 : vector<1x128xf32>
      %27 = tpu.reciprocal %26 : vector<1x128xf32> -> vector<1x128xf32>
      %c0_18 = arith.constant 0 : index
      %c0_19 = arith.constant 0 : index
      %28 = vector.load %arg4[%c0_18, %c0_19] : memref<128x128xf32, #tpu.memory_space<vmem>>, vector<128x128xf32>
      %29 = tpu.transpose %27, [1, 0] : vector<1x128xf32> -> vector<128x1xf32>
      %30 = vector.broadcast %29 : vector<128x1xf32> to vector<128x128xf32>
      %31 = arith.mulf %28, %30 : vector<128x128xf32>
      %c0_20 = arith.constant 0 : index
      %c0_21 = arith.constant 0 : index
      %32 = vector.load %arg4[%c0_20, %c0_21] : memref<128x128xf32, #tpu.memory_space<vmem>>, vector<128x128xf32>
      tpu.vector_store %arg4[%c0_20, %c0_21], %31 {strides = array<i32>} : memref<128x128xf32, #tpu.memory_space<vmem>>, vector<128x128xf32>,
    } else {
    }
    return
  }
  func.func @transform_0(%arg0: i32, %arg1: i32) -> (i32, i32) {
    %c0_i32 = arith.constant 0 : i32
    %c0_i32_0 = arith.constant 0 : i32
    return %arg1, %c0_i32 : i32, i32
  }
  func.func @transform_1(%arg0: i32, %arg1: i32) -> (i32, i32) {
    %c0_i32 = arith.constant 0 : i32
    return %arg1, %arg0 : i32, i32
  }
  func.func @transform_2(%arg0: i32, %arg1: i32) -> (i32, i32) {
    %c0_i32 = arith.constant 0 : i32
    %c0_i32_0 = arith.constant 0 : i32
    return %c0_i32, %arg0 : i32, i32
  }
}

</mosaic_0001>

<llo_original>
// kernel: tpu_custom_call.1
$region0: #{tpu_custom_call.1}
  #allocation0 [shape = 'u32[]', space=smem, size = 0x4, offset = 0x4, fixed_abs, tag = 'smem constant byte address 0x4 - core index']
  #allocation1 [shape = 'u32[144,128]{1,0:T(1,128)}', space=vmem, size = 0x12000, scoped, tag = 'internal scratch']
  #allocation2 [shape = 'f32[1,128]{1,0:T(1,128)}', space=vmem, size = 0x200, scoped, tag = 'scratch operand']
  %s0 = inlined_call_operand.vmem [shape: s32[256,1], index: 0, kind: input, shape index: {}]
  %s1 = inlined_call_operand.vmem [shape: f32[256,128], index: 1, kind: input, shape index: {}]
  %s2 = inlined_call_operand.hbm [shape: f32[128,128], index: 2, kind: output, shape index: {}]
  %s3 = sld [smem:[#allocation0]]
  $region26: #{tpu_custom_call.1} parent=0
    _
  %s5 = ssub.s32 1, %s3
  %s6 = scalar_select 0, %s5, %s3
  $region1: #{tpu_custom_call.1} parent=0
    #allocation3 [shape = 'u8[65536]{0}', space=vmem, size = 0x10000, scoped, tag = 'output window, operand 0, single buffered']
    #allocation4 [shape = 's32[1]{0}', space=sflag, size = 0x4, scoped, tag = 'scoped memory for tpu_custom_call.1']
    %7 = vsyncpa [#allocation4], 0
    // Predicated region
    $region2: #{tpu_custom_call.1} parent=1 // pred_check
      _
    $region3: #{tpu_custom_call.1} parent=1 // pred_check_branch
      %9 = sbr.rel (0) target = $region5
    $region4: #{tpu_custom_call.1} parent=1 // pred_region
      _
    $region5: #{tpu_custom_call.1} parent=1 // pred_fallthru
      _
    // Predicated region
    $region6: #{tpu_custom_call.1} parent=1 // pred_check
      _
    $region7: #{tpu_custom_call.1} parent=1 // pred_check_branch
      %11 = sbr.rel (0) target = $region9
    $region8: #{tpu_custom_call.1} parent=1 // pred_region
      _
    $region9: #{tpu_custom_call.1} parent=1 // pred_fallthru
      _
    %p12 = scmp.eq.s32.totalorder 0, 0
    // Predicated region
    $region10: #{tpu_custom_call.1} parent=1 // pred_check
      %p13 = pneg %p12
    $region11: #{tpu_custom_call.1} parent=1 // pred_check_branch
      %15 = sbr.rel (%p13) target = $region13
    $region12: #{tpu_custom_call.1} parent=1 // pred_region
      %16 = vst [vmem:[#allocation3] sm:$0xff] 0.0
      %17 = vst [vmem:[#allocation3 + $0x8] sm:$0xff] 0.0
      %18 = vst [vmem:[#allocation3 + $0x10] sm:$0xff] 0.0
      %19 = vst [vmem:[#allocation3 + $0x18] sm:$0xff] 0.0
      %20 = vst [vmem:[#allocation3 + $0x20] sm:$0xff] 0.0
      %21 = vst [vmem:[#allocation3 + $0x28] sm:$0xff] 0.0
      %22 = vst [vmem:[#allocation3 + $0x30] sm:$0xff] 0.0
      %23 = vst [vmem:[#allocation3 + $0x38] sm:$0xff] 0.0
      %24 = vst [vmem:[#allocation3 + $0x40] sm:$0xff] 0.0
      %25 = vst [vmem:[#allocation3 + $0x48] sm:$0xff] 0.0
      %26 = vst [vmem:[#allocation3 + $0x50] sm:$0xff] 0.0
      %27 = vst [vmem:[#allocation3 + $0x58] sm:$0xff] 0.0
      %28 = vst [vmem:[#allocation3 + $0x60] sm:$0xff] 0.0
      %29 = vst [vmem:[#allocation3 + $0x68] sm:$0xff] 0.0
      %30 = vst [vmem:[#allocation3 + $0x70] sm:$0xff] 0.0
      %31 = vst [vmem:[#allocation3 + $0x78] sm:$0xff] 0.0
      %32 = vst [vmem:[#allocation2] sm:$0x1] 0.0
    $region13: #{tpu_custom_call.1} parent=1 // pred_fallthru
      _
    %v33 = vld [vmem:[%s0] sm:$0xff]
    %v34 = vld [vmem:[%s0 + $0x8] sm:$0xff]
    %v35 = vld [vmem:[%s0 + $0x10] sm:$0xff]
    %v36 = vld [vmem:[%s0 + $0x18] sm:$0xff]
    %v37 = vld [vmem:[%s0 + $0x20] sm:$0xff]
    %v38 = vld [vmem:[%s0 + $0x28] sm:$0xff]
    %v39 = vld [vmem:[%s0 + $0x30] sm:$0xff]
    %v40 = vld [vmem:[%s0 + $0x38] sm:$0xff]
    %v41 = vld [vmem:[%s0 + $0x40] sm:$0xff]
    %v42 = vld [vmem:[%s0 + $0x48] sm:$0xff]
    %v43 = vld [vmem:[%s0 + $0x50] sm:$0xff]
    %v44 = vld [vmem:[%s0 + $0x58] sm:$0xff]
    %v45 = vld [vmem:[%s0 + $0x60] sm:$0xff]
    %v46 = vld [vmem:[%s0 + $0x68] sm:$0xff]
    %v47 = vld [vmem:[%s0 + $0x70] sm:$0xff]
    %v48 = vld [vmem:[%s0 + $0x78] sm:$0xff]
    %v49 = vld [vmem:[%s0 + $0x80] sm:$0xff]
    %v50 = vld [vmem:[%s0 + $0x88] sm:$0xff]
    %v51 = vld [vmem:[%s0 + $0x90] sm:$0xff]
    %v52 = vld [vmem:[%s0 + $0x98] sm:$0xff]
    %v53 = vld [vmem:[%s0 + $0xa0] sm:$0xff]
    %v54 = vld [vmem:[%s0 + $0xa8] sm:$0xff]
    %v55 = vld [vmem:[%s0 + $0xb0] sm:$0xff]
    %v56 = vld [vmem:[%s0 + $0xb8] sm:$0xff]
    %v57 = vld [vmem:[%s0 + $0xc0] sm:$0xff]
    %v58 = vld [vmem:[%s0 + $0xc8] sm:$0xff]
    %v59 = vld [vmem:[%s0 + $0xd0] sm:$0xff]
    %v60 = vld [vmem:[%s0 + $0xd8] sm:$0xff]
    %v61 = vld [vmem:[%s0 + $0xe0] sm:$0xff]
    %v62 = vld [vmem:[%s0 + $0xe8] sm:$0xff]
    %v63 = vld [vmem:[%s0 + $0xf0] sm:$0xff]
    %v64 = vld [vmem:[%s0 + $0xf8] sm:$0xff]
    %v65 = vlaneseq
    %v66 = vand.u32 %v65, 127
    %67 = vset.pattern.permute.xlu0 0
    %68 = vperm.xlu0 %67, %v33
    %v69 = vpop.permute.xlu0 %68
    %70 = vset.pattern.permute.xlu0 0
    %71 = vperm.xlu0 %70, %v34
    %v72 = vpop.permute.xlu0 %71
    %73 = vset.pattern.permute.xlu0 0
    %74 = vperm.xlu0 %73, %v35
    %v75 = vpop.permute.xlu0 %74
    %76 = vset.pattern.permute.xlu0 0
    %77 = vperm.xlu0 %76, %v36
    %v78 = vpop.permute.xlu0 %77
    %79 = vset.pattern.permute.xlu0 0
    %80 = vperm.xlu0 %79, %v37
    %v81 = vpop.permute.xlu0 %80
    %82 = vset.pattern.permute.xlu0 0
    %83 = vperm.xlu0 %82, %v38
    %v84 = vpop.permute.xlu0 %83
    %85 = vset.pattern.permute.xlu0 0
    %86 = vperm.xlu0 %85, %v39
    %v87 = vpop.permute.xlu0 %86
    %88 = vset.pattern.permute.xlu0 0
    %89 = vperm.xlu0 %88, %v40
    %v90 = vpop.permute.xlu0 %89
    %91 = vset.pattern.permute.xlu0 0
    %92 = vperm.xlu0 %91, %v41
    %v93 = vpop.permute.xlu0 %92
    %94 = vset.pattern.permute.xlu0 0
    %95 = vperm.xlu0 %94, %v42
    %v96 = vpop.permute.xlu0 %95
    %97 = vset.pattern.permute.xlu0 0
    %98 = vperm.xlu0 %97, %v43
    %v99 = vpop.permute.xlu0 %98
    %100 = vset.pattern.permute.xlu0 0
    %101 = vperm.xlu0 %100, %v44
    %v102 = vpop.permute.xlu0 %101
    %103 = vset.pattern.permute.xlu0 0
    %104 = vperm.xlu0 %103, %v45
    %v105 = vpop.permute.xlu0 %104
    %106 = vset.pattern.permute.xlu0 0
    %107 = vperm.xlu0 %106, %v46
    %v108 = vpop.permute.xlu0 %107
    %109 = vset.pattern.permute.xlu0 0
    %110 = vperm.xlu0 %109, %v47
    %v111 = vpop.permute.xlu0 %110
    %112 = vset.pattern.permute.xlu0 0
    %113 = vperm.xlu0 %112, %v48
    %v114 = vpop.permute.xlu0 %113
    %115 = vset.pattern.permute.xlu0 0
    %116 = vperm.xlu0 %115, %v49
    %v117 = vpop.permute.xlu0 %116
    %118 = vset.pattern.permute.xlu0 0
    %119 = vperm.xlu0 %118, %v50
    %v120 = vpop.permute.xlu0 %119
    %121 = vset.pattern.permute.xlu0 0
    %122 = vperm.xlu0 %121, %v51
    %v123 = vpop.permute.xlu0 %122
    %124 = vset.pattern.permute.xlu0 0
    %125 = vperm.xlu0 %124, %v52
    %v126 = vpop.permute.xlu0 %125
    %127 = vset.pattern.permute.xlu0 0
    %128 = vperm.xlu0 %127, %v53
    %v129 = vpop.permute.xlu0 %128
    %130 = vset.pattern.permute.xlu0 0
    %131 = vperm.xlu0 %130, %v54
    %v132 = vpop.permute.xlu0 %131
    %133 = vset.pattern.permute.xlu0 0
    %134 = vperm.xlu0 %133, %v55
    %v135 = vpop.permute.xlu0 %134
    %136 = vset.pattern.permute.xlu0 0
    %137 = vperm.xlu0 %136, %v56
    %v138 = vpop.permute.xlu0 %137
    %139 = vset.pattern.permute.xlu0 0
    %140 = vperm.xlu0 %139, %v57
    %v141 = vpop.permute.xlu0 %140
    %142 = vset.pattern.permute.xlu0 0
    %143 = vperm.xlu0 %142, %v58
    %v144 = vpop.permute.xlu0 %143
    %145 = vset.pattern.permute.xlu0 0
    %146 = vperm.xlu0 %145, %v59
    %v147 = vpop.permute.xlu0 %146
    %148 = vset.pattern.permute.xlu0 0
    %149 = vperm.xlu0 %148, %v60
    %v150 = vpop.permute.xlu0 %149
    %151 = vset.pattern.permute.xlu0 0
    %152 = vperm.xlu0 %151, %v61
    %v153 = vpop.permute.xlu0 %152
    %154 = vset.pattern.permute.xlu0 0
    %155 = vperm.xlu0 %154, %v62
    %v156 = vpop.permute.xlu0 %155
    %157 = vset.pattern.permute.xlu0 0
    %158 = vperm.xlu0 %157, %v63
    %v159 = vpop.permute.xlu0 %158
    %160 = vset.pattern.permute.xlu0 0
    %161 = vperm.xlu0 %160, %v64
    %v162 = vpop.permute.xlu0 %161
    %vm163 = vcmp.eq.s32.totalorder %v66, %v69
    %vm164 = vcmp.eq.s32.totalorder %v66, %v72
    %vm165 = vcmp.eq.s32.totalorder %v66, %v75
    %vm166 = vcmp.eq.s32.totalorder %v66, %v78
    %vm167 = vcmp.eq.s32.totalorder %v66, %v81
    %vm168 = vcmp.eq.s32.totalorder %v66, %v84
    %vm169 = vcmp.eq.s32.totalorder %v66, %v87
    %vm170 = vcmp.eq.s32.totalorder %v66, %v90
    %vm171 = vcmp.eq.s32.totalorder %v66, %v93
    %vm172 = vcmp.eq.s32.totalorder %v66, %v96
    %vm173 = vcmp.eq.s32.totalorder %v66, %v99
    %vm174 = vcmp.eq.s32.totalorder %v66, %v102
    %vm175 = vcmp.eq.s32.totalorder %v66, %v105
    %vm176 = vcmp.eq.s32.totalorder %v66, %v108
    %vm177 = vcmp.eq.s32.totalorder %v66, %v111
    %vm178 = vcmp.eq.s32.totalorder %v66, %v114
    %vm179 = vcmp.eq.s32.totalorder %v66, %v117
    %vm180 = vcmp.eq.s32.totalorder %v66, %v120
    %vm181 = vcmp.eq.s32.totalorder %v66, %v123
    %vm182 = vcmp.eq.s32.totalorder %v66, %v126
    %vm183 = vcmp.eq.s32.totalorder %v66, %v129
    %vm184 = vcmp.eq.s32.totalorder %v66, %v132
    %vm185 = vcmp.eq.s32.totalorder %v66, %v135
    %vm186 = vcmp.eq.s32.totalorder %v66, %v138
    %vm187 = vcmp.eq.s32.totalorder %v66, %v141
    %vm188 = vcmp.eq.s32.totalorder %v66, %v144
    %vm189 = vcmp.eq.s32.totalorder %v66, %v147
    %vm190 = vcmp.eq.s32.totalorder %v66, %v150
    %vm191 = vcmp.eq.s32.totalorder %v66, %v153
    %vm192 = vcmp.eq.s32.totalorder %v66, %v156
    %vm193 = vcmp.eq.s32.totalorder %v66, %v159
    %vm194 = vcmp.eq.s32.totalorder %v66, %v162
    %v195 = vsel %vm163, 1, 0
    %v196 = vsel %vm164, 1, 0
    %v197 = vsel %vm165, 1, 0
    %v198 = vsel %vm166, 1, 0
    %v199 = vsel %vm167, 1, 0
    %v200 = vsel %vm168, 1, 0
    %v201 = vsel %vm169, 1, 0
    %v202 = vsel %vm170, 1, 0
    %v203 = vsel %vm171, 1, 0
    %v204 = vsel %vm172, 1, 0
    %v205 = vsel %vm173, 1, 0
    %v206 = vsel %vm174, 1, 0
    %v207 = vsel %vm175, 1, 0
    %v208 = vsel %vm176, 1, 0
    %v209 = vsel %vm177, 1, 0
    %v210 = vsel %vm178, 1, 0
    %v211 = vsel %vm179, 1, 0
    %v212 = vsel %vm180, 1, 0
    %v213 = vsel %vm181, 1, 0
    %v214 = vsel %vm182, 1, 0
    %v215 = vsel %vm183, 1, 0
    %v216 = vsel %vm184, 1, 0
    %v217 = vsel %vm185, 1, 0
    %v218 = vsel %vm186, 1, 0
    %v219 = vsel %vm187, 1, 0
    %v220 = vsel %vm188, 1, 0
    %v221 = vsel %vm189, 1, 0
    %v222 = vsel %vm190, 1, 0
    %v223 = vsel %vm191, 1, 0
    %v224 = vsel %vm192, 1, 0
    %v225 = vsel %vm193, 1, 0
    %v226 = vsel %vm194, 1, 0
    %v227 = vcvt.s32.f32 %v195
    %v228 = vcvt.s32.f32 %v196
    %v229 = vcvt.s32.f32 %v197
    %v230 = vcvt.s32.f32 %v198
    %v231 = vcvt.s32.f32 %v199
    %v232 = vcvt.s32.f32 %v200
    %v233 = vcvt.s32.f32 %v201
    %v234 = vcvt.s32.f32 %v202
    %v235 = vcvt.s32.f32 %v203
    %v236 = vcvt.s32.f32 %v204
    %v237 = vcvt.s32.f32 %v205
    %v238 = vcvt.s32.f32 %v206
    %v239 = vcvt.s32.f32 %v207
    %v240 = vcvt.s32.f32 %v208
    %v241 = vcvt.s32.f32 %v209
    %v242 = vcvt.s32.f32 %v210
    %v243 = vcvt.s32.f32 %v211
    %v244 = vcvt.s32.f32 %v212
    %v245 = vcvt.s32.f32 %v213
    %v246 = vcvt.s32.f32 %v214
    %v247 = vcvt.s32.f32 %v215
    %v248 = vcvt.s32.f32 %v216
    %v249 = vcvt.s32.f32 %v217
    %v250 = vcvt.s32.f32 %v218
    %v251 = vcvt.s32.f32 %v219
    %v252 = vcvt.s32.f32 %v220
    %v253 = vcvt.s32.f32 %v221
    %v254 = vcvt.s32.f32 %v222
    %v255 = vcvt.s32.f32 %v223
    %v256 = vcvt.s32.f32 %v224
    %v257 = vcvt.s32.f32 %v225
    %v258 = vcvt.s32.f32 %v226
    %v259 = vld [vmem:[#allocation3] sm:$0xff]
    %v260 = vld [vmem:[#allocation3 + $0x8] sm:$0xff]
    %v261 = vld [vmem:[#allocation3 + $0x10] sm:$0xff]
    %v262 = vld [vmem:[#allocation3 + $0x18] sm:$0xff]
    %v263 = vld [vmem:[#allocation3 + $0x20] sm:$0xff]
    %v264 = vld [vmem:[#allocation3 + $0x28] sm:$0xff]
    %v265 = vld [vmem:[#allocation3 + $0x30] sm:$0xff]
    %v266 = vld [vmem:[#allocation3 + $0x38] sm:$0xff]
    %v267 = vld [vmem:[#allocation3 + $0x40] sm:$0xff]
    %v268 = vld [vmem:[#allocation3 + $0x48] sm:$0xff]
    %v269 = vld [vmem:[#allocation3 + $0x50] sm:$0xff]
    %v270 = vld [vmem:[#allocation3 + $0x58] sm:$0xff]
    %v271 = vld [vmem:[#allocation3 + $0x60] sm:$0xff]
    %v272 = vld [vmem:[#allocation3 + $0x68] sm:$0xff]
    %v273 = vld [vmem:[#allocation3 + $0x70] sm:$0xff]
    %v274 = vld [vmem:[#allocation3 + $0x78] sm:$0xff]
    %v275 = vld [vmem:[%s1] sm:$0xff]
    %v276 = vld [vmem:[%s1 + $0x8] sm:$0xff]
    %v277 = vld [vmem:[%s1 + $0x10] sm:$0xff]
    %v278 = vld [vmem:[%s1 + $0x18] sm:$0xff]
    %v279 = vld [vmem:[%s1 + $0x20] sm:$0xff]
    %v280 = vld [vmem:[%s1 + $0x28] sm:$0xff]
    %v281 = vld [vmem:[%s1 + $0x30] sm:$0xff]
    %v282 = vld [vmem:[%s1 + $0x38] sm:$0xff]
    %v283 = vld [vmem:[%s1 + $0x40] sm:$0xff]
    %v284 = vld [vmem:[%s1 + $0x48] sm:$0xff]
    %v285 = vld [vmem:[%s1 + $0x50] sm:$0xff]
    %v286 = vld [vmem:[%s1 + $0x58] sm:$0xff]
    %v287 = vld [vmem:[%s1 + $0x60] sm:$0xff]
    %v288 = vld [vmem:[%s1 + $0x68] sm:$0xff]
    %v289 = vld [vmem:[%s1 + $0x70] sm:$0xff]
    %v290 = vld [vmem:[%s1 + $0x78] sm:$0xff]
    %v291 = vld [vmem:[%s1 + $0x80] sm:$0xff]
    %v292 = vld [vmem:[%s1 + $0x88] sm:$0xff]
    %v293 = vld [vmem:[%s1 + $0x90] sm:$0xff]
    %v294 = vld [vmem:[%s1 + $0x98] sm:$0xff]
    %v295 = vld [vmem:[%s1 + $0xa0] sm:$0xff]
    %v296 = vld [vmem:[%s1 + $0xa8] sm:$0xff]
    %v297 = vld [vmem:[%s1 + $0xb0] sm:$0xff]
    %v298 = vld [vmem:[%s1 + $0xb8] sm:$0xff]
    %v299 = vld [vmem:[%s1 + $0xc0] sm:$0xff]
    %v300 = vld [vmem:[%s1 + $0xc8] sm:$0xff]
    %v301 = vld [vmem:[%s1 + $0xd0] sm:$0xff]
    %v302 = vld [vmem:[%s1 + $0xd8] sm:$0xff]
    %v303 = vld [vmem:[%s1 + $0xe0] sm:$0xff]
    %v304 = vld [vmem:[%s1 + $0xe8] sm:$0xff]
    %v305 = vld [vmem:[%s1 + $0xf0] sm:$0xff]
    %v306 = vld [vmem:[%s1 + $0xf8] sm:$0xff]
    %307 = vxpose.xlu0.b32.start [1/16] %v227, 128
    %308 = vxpose.xlu0.b32.cont [2/16] %v228, 128
    %309 = vxpose.xlu0.b32.cont [3/16] %v229, 128
    %310 = vxpose.xlu0.b32.cont [4/16] %v230, 128
    %311 = vxpose.xlu0.b32.cont [5/16] %v231, 128
    %312 = vxpose.xlu0.b32.cont [6/16] %v232, 128
    %313 = vxpose.xlu0.b32.cont [7/16] %v233, 128
    %314 = vxpose.xlu0.b32.cont [8/16] %v234, 128
    %315 = vxpose.xlu0.b32.cont [9/16] %v235, 128
    %316 = vxpose.xlu0.b32.cont [10/16] %v236, 128
    %317 = vxpose.xlu0.b32.cont [11/16] %v237, 128
    %318 = vxpose.xlu0.b32.cont [12/16] %v238, 128
    %319 = vxpose.xlu0.b32.cont [13/16] %v239, 128
    %320 = vxpose.xlu0.b32.cont [14/16] %v240, 128
    %321 = vxpose.xlu0.b32.cont [15/16] %v241, 128
    %322 = vxpose.xlu0.b32.end [16/16] %v242, 128
    %v323 = vpop.trf.xlu0
    %v324 = vpop.trf.xlu0
    %v325 = vpop.trf.xlu0
    %v326 = vpop.trf.xlu0
    %v327 = vpop.trf.xlu0
    %v328 = vpop.trf.xlu0
    %v329 = vpop.trf.xlu0
    %v330 = vpop.trf.xlu0
    %v331 = vpop.trf.xlu0
    %v332 = vpop.trf.xlu0
    %v333 = vpop.trf.xlu0
    %v334 = vpop.trf.xlu0
    %v335 = vpop.trf.xlu0
    %v336 = vpop.trf.xlu0
    %v337 = vpop.trf.xlu0
    %v338 = vpop.trf.xlu0
    %339 = vxpose.xlu0.b32.start [1/16] %v243, 128
    %340 = vxpose.xlu0.b32.cont [2/16] %v244, 128
    %341 = vxpose.xlu0.b32.cont [3/16] %v245, 128
    %342 = vxpose.xlu0.b32.cont [4/16] %v246, 128
    %343 = vxpose.xlu0.b32.cont [5/16] %v247, 128
    %344 = vxpose.xlu0.b32.cont [6/16] %v248, 128
    %345 = vxpose.xlu0.b32.cont [7/16] %v249, 128
    %346 = vxpose.xlu0.b32.cont [8/16] %v250, 128
    %347 = vxpose.xlu0.b32.cont [9/16] %v251, 128
    %348 = vxpose.xlu0.b32.cont [10/16] %v252, 128
    %349 = vxpose.xlu0.b32.cont [11/16] %v253, 128
    %350 = vxpose.xlu0.b32.cont [12/16] %v254, 128
    %351 = vxpose.xlu0.b32.cont [13/16] %v255, 128
    %352 = vxpose.xlu0.b32.cont [14/16] %v256, 128
    %353 = vxpose.xlu0.b32.cont [15/16] %v257, 128
    %354 = vxpose.xlu0.b32.end [16/16] %v258, 128
    %v355 = vpop.trf.xlu0
    %v356 = vpop.trf.xlu0
    %v357 = vpop.trf.xlu0
    %v358 = vpop.trf.xlu0
    %v359 = vpop.trf.xlu0
    %v360 = vpop.trf.xlu0
    %v361 = vpop.trf.xlu0
    %v362 = vpop.trf.xlu0
    %v363 = vpop.trf.xlu0
    %v364 = vpop.trf.xlu0
    %v365 = vpop.trf.xlu0
    %v366 = vpop.trf.xlu0
    %v367 = vpop.trf.xlu0
    %v368 = vpop.trf.xlu0
    %v369 = vpop.trf.xlu0
    %v370 = vpop.trf.xlu0
    %371 = vmatprep.subr.mxu0 0.0
    %372 = vmatpush1.msra.mxu0 %v290
    %373 = vmatprep.subr.mxu0 0.0
    %374 = vmatpush1.msra.mxu0 %v289
    %375 = vmatprep.subr.mxu0 0.0
    %376 = vmatpush1.msra.mxu0 %v288
    %377 = vmatprep.subr.mxu0 0.0
    %378 = vmatpush1.msra.mxu0 %v287
    %379 = vmatprep.subr.mxu0 0.0
    %380 = vmatpush1.msra.mxu0 %v286
    %381 = vmatprep.subr.mxu0 0.0
    %382 = vmatpush1.msra.mxu0 %v285
    %383 = vmatprep.subr.mxu0 0.0
    %384 = vmatpush1.msra.mxu0 %v284
    %385 = vmatprep.subr.mxu0 0.0
    %386 = vmatpush1.msra.mxu0 %v283
    %387 = vmatprep.subr.mxu0 0.0
    %388 = vmatpush1.msra.mxu0 %v282
    %389 = vmatprep.subr.mxu0 0.0
    %390 = vmatpush1.msra.mxu0 %v281
    %391 = vmatprep.subr.mxu0 0.0
    %392 = vmatpush1.msra.mxu0 %v280
    %393 = vmatprep.subr.mxu0 0.0
    %394 = vmatpush1.msra.mxu0 %v279
    %395 = vmatprep.subr.mxu0 0.0
    %396 = vmatpush1.msra.mxu0 %v278
    %397 = vmatprep.subr.mxu0 0.0
    %398 = vmatpush1.msra.mxu0 %v277
    %399 = vmatprep.subr.mxu0 0.0
    %400 = vmatpush1.msra.mxu0 %v276
    %401 = vmatprep.subr.mxu0 0.0
    %402 = vmatpush1.msra.mxu0 %v275
    %403 = vmatprep.subr.mxu0 0.0
    %404 = vmatpush2.msra.mxu0 %v306
    %405 = vmatprep.subr.mxu0 0.0
    %406 = vmatpush2.msra.mxu0 %v305
    %407 = vmatprep.subr.mxu0 0.0
    %408 = vmatpush2.msra.mxu0 %v304
    %409 = vmatprep.subr.mxu0 0.0
    %410 = vmatpush2.msra.mxu0 %v303
    %411 = vmatprep.subr.mxu0 0.0
    %412 = vmatpush2.msra.mxu0 %v302
    %413 = vmatprep.subr.mxu0 0.0
    %414 = vmatpush2.msra.mxu0 %v301
    %415 = vmatprep.subr.mxu0 0.0
    %416 = vmatpush2.msra.mxu0 %v300
    %417 = vmatprep.subr.mxu0 0.0
    %418 = vmatpush2.msra.mxu0 %v299
    %419 = vmatprep.subr.mxu0 0.0
    %420 = vmatpush2.msra.mxu0 %v298
    %421 = vmatprep.subr.mxu0 0.0
    %422 = vmatpush2.msra.mxu0 %v297
    %423 = vmatprep.subr.mxu0 0.0
    %424 = vmatpush2.msra.mxu0 %v296
    %425 = vmatprep.subr.mxu0 0.0
    %426 = vmatpush2.msra.mxu0 %v295
    %427 = vmatprep.subr.mxu0 0.0
    %428 = vmatpush2.msra.mxu0 %v294
    %429 = vmatprep.subr.mxu0 0.0
    %430 = vmatpush2.msra.mxu0 %v293
    %431 = vmatprep.subr.mxu0 0.0
    %432 = vmatpush2.msra.mxu0 %v292
    %433 = vmatprep.subr.mxu0 0.0
    %434 = vmatpush2.msra.mxu0 %v291
    %435 = vmatprep.mubr.f32.mxu0 %v355
    %436 = vmatmul.mubr.f32.gmra.mxu0 %v323
    %v437 = vpop.f32.mrf.mxu0
    %v438 = vadd.f32 0.0, %v437
    %v439 = vpop.f32.mrf.mxu0
    %440 = vmatprep.mubr.f32.mxu0 %v356
    %441 = vmatmul.mubr.f32.gmra.mxu0 %v324
    %v442 = vpop.f32.mrf.mxu0
    %v443 = vadd.f32 0.0, %v442
    %v444 = vpop.f32.mrf.mxu0
    %445 = vmatprep.mubr.f32.mxu0 %v357
    %446 = vmatmul.mubr.f32.gmra.mxu0 %v325
    %v447 = vpop.f32.mrf.mxu0
    %v448 = vadd.f32 0.0, %v447
    %v449 = vpop.f32.mrf.mxu0
    %450 = vmatprep.mubr.f32.mxu0 %v358
    %451 = vmatmul.mubr.f32.gmra.mxu0 %v326
    %v452 = vpop.f32.mrf.mxu0
    %v453 = vadd.f32 0.0, %v452
    %v454 = vpop.f32.mrf.mxu0
    %455 = vmatprep.mubr.f32.mxu0 %v359
    %456 = vmatmul.mubr.f32.gmra.mxu0 %v327
    %v457 = vpop.f32.mrf.mxu0
    %v458 = vadd.f32 0.0, %v457
    %v459 = vpop.f32.mrf.mxu0
    %460 = vmatprep.mubr.f32.mxu0 %v360
    %461 = vmatmul.mubr.f32.gmra.mxu0 %v328
    %v462 = vpop.f32.mrf.mxu0
    %v463 = vadd.f32 0.0, %v462
    %v464 = vpop.f32.mrf.mxu0
    %465 = vmatprep.mubr.f32.mxu0 %v361
    %466 = vmatmul.mubr.f32.gmra.mxu0 %v329
    %v467 = vpop.f32.mrf.mxu0
    %v468 = vadd.f32 0.0, %v467
    %v469 = vpop.f32.mrf.mxu0
    %470 = vmatprep.mubr.f32.mxu0 %v362
    %471 = vmatmul.mubr.f32.gmra.mxu0 %v330
    %v472 = vpop.f32.mrf.mxu0
    %v473 = vadd.f32 0.0, %v472
    %v474 = vpop.f32.mrf.mxu0
    %475 = vmatprep.mubr.f32.mxu0 %v363
    %476 = vmatmul.mubr.f32.gmra.mxu0 %v331
    %v477 = vpop.f32.mrf.mxu0
    %v478 = vadd.f32 0.0, %v477
    %v479 = vpop.f32.mrf.mxu0
    %480 = vmatprep.mubr.f32.mxu0 %v364
    %481 = vmatmul.mubr.f32.gmra.mxu0 %v332
    %v482 = vpop.f32.mrf.mxu0
    %v483 = vadd.f32 0.0, %v482
    %v484 = vpop.f32.mrf.mxu0
    %485 = vmatprep.mubr.f32.mxu0 %v365
    %486 = vmatmul.mubr.f32.gmra.mxu0 %v333
    %v487 = vpop.f32.mrf.mxu0
    %v488 = vadd.f32 0.0, %v487
    %v489 = vpop.f32.mrf.mxu0
    %490 = vmatprep.mubr.f32.mxu0 %v366
    %491 = vmatmul.mubr.f32.gmra.mxu0 %v334
    %v492 = vpop.f32.mrf.mxu0
    %v493 = vadd.f32 0.0, %v492
    %v494 = vpop.f32.mrf.mxu0
    %495 = vmatprep.mubr.f32.mxu0 %v367
    %496 = vmatmul.mubr.f32.gmra.mxu0 %v335
    %v497 = vpop.f32.mrf.mxu0
    %v498 = vadd.f32 0.0, %v497
    %v499 = vpop.f32.mrf.mxu0
    %500 = vmatprep.mubr.f32.mxu0 %v368
    %501 = vmatmul.mubr.f32.gmra.mxu0 %v336
    %v502 = vpop.f32.mrf.mxu0
    %v503 = vadd.f32 0.0, %v502
    %v504 = vpop.f32.mrf.mxu0
    %505 = vmatprep.mubr.f32.mxu0 %v369
    %506 = vmatmul.mubr.f32.gmra.mxu0 %v337
    %v507 = vpop.f32.mrf.mxu0
    %v508 = vadd.f32 0.0, %v507
    %v509 = vpop.f32.mrf.mxu0
    %510 = vmatprep.mubr.f32.mxu0 %v370
    %511 = vmatmul.mubr.f32.gmra.mxu0 %v338
    %v512 = vpop.f32.mrf.mxu0
    %v513 = vadd.f32 0.0, %v512
    %v514 = vpop.f32.mrf.mxu0
    %515 = vdwg.mxu0
    %v516 = vadd.f32 %v259, %v438
    %v517 = vadd.f32 %v260, %v443
    %v518 = vadd.f32 %v261, %v448
    %v519 = vadd.f32 %v262, %v453
    %v520 = vadd.f32 %v263, %v458
    %v521 = vadd.f32 %v264, %v463
    %v522 = vadd.f32 %v265, %v468
    %v523 = vadd.f32 %v266, %v473
    %v524 = vadd.f32 %v267, %v478
    %v525 = vadd.f32 %v268, %v483
    %v526 = vadd.f32 %v269, %v488
    %v527 = vadd.f32 %v270, %v493
    %v528 = vadd.f32 %v271, %v498
    %v529 = vadd.f32 %v272, %v503
    %v530 = vadd.f32 %v273, %v508
    %v531 = vadd.f32 %v274, %v513
    %532 = vst [vmem:[#allocation3] sm:$0xff] %v516
    %533 = vst [vmem:[#allocation3 + $0x8] sm:$0xff] %v517
    %534 = vst [vmem:[#allocation3 + $0x10] sm:$0xff] %v518
    %535 = vst [vmem:[#allocation3 + $0x18] sm:$0xff] %v519
    %536 = vst [vmem:[#allocation3 + $0x20] sm:$0xff] %v520
    %537 = vst [vmem:[#allocation3 + $0x28] sm:$0xff] %v521
    %538 = vst [vmem:[#allocation3 + $0x30] sm:$0xff] %v522
    %539 = vst [vmem:[#allocation3 + $0x38] sm:$0xff] %v523
    %540 = vst [vmem:[#allocation3 + $0x40] sm:$0xff] %v524
    %541 = vst [vmem:[#allocation3 + $0x48] sm:$0xff] %v525
    %542 = vst [vmem:[#allocation3 + $0x50] sm:$0xff] %v526
    %543 = vst [vmem:[#allocation3 + $0x58] sm:$0xff] %v527
    %544 = vst [vmem:[#allocation3 + $0x60] sm:$0xff] %v528
    %545 = vst [vmem:[#allocation3 + $0x68] sm:$0xff] %v529
    %546 = vst [vmem:[#allocation3 + $0x70] sm:$0xff] %v530
    %547 = vst [vmem:[#allocation3 + $0x78] sm:$0xff] %v531
    %v548 = vld [vmem:[#allocation2] sm:$0x1]
    %v549 = vadd.f32 %v227, %v228
    %v550 = vadd.f32 %v549, %v229
    %v551 = vadd.f32 %v550, %v230
    %v552 = vadd.f32 %v551, %v231
    %v553 = vadd.f32 %v552, %v232
    %v554 = vadd.f32 %v553, %v233
    %v555 = vadd.f32 %v554, %v234
    %v556 = vadd.f32 %v555, %v235
    %v557 = vadd.f32 %v556, %v236
    %v558 = vadd.f32 %v557, %v237
    %v559 = vadd.f32 %v558, %v238
    %v560 = vadd.f32 %v559, %v239
    %v561 = vadd.f32 %v560, %v240
    %v562 = vadd.f32 %v561, %v241
    %v563 = vadd.f32 %v562, %v242
    %v564 = vadd.f32 %v563, %v243
    %v565 = vadd.f32 %v564, %v244
    %v566 = vadd.f32 %v565, %v245
    %v567 = vadd.f32 %v566, %v246
    %v568 = vadd.f32 %v567, %v247
    %v569 = vadd.f32 %v568, %v248
    %v570 = vadd.f32 %v569, %v249
    %v571 = vadd.f32 %v570, %v250
    %v572 = vadd.f32 %v571, %v251
    %v573 = vadd.f32 %v572, %v252
    %v574 = vadd.f32 %v573, %v253
    %v575 = vadd.f32 %v574, %v254
    %v576 = vadd.f32 %v575, %v255
    %v577 = vadd.f32 %v576, %v256
    %v578 = vadd.f32 %v577, %v257
    %v579 = vadd.f32 %v578, %v258
    %v580 = vrot.slane %v579, 4
    %v581 = vadd.f32 %v579, %v580
    %v582 = vrot.slane %v581, 2
    %v583 = vadd.f32 %v581, %v582
    %v584 = vrot.slane %v583, 1
    %v585 = vadd.f32 %v583, %v584
    %v586 = vadd.f32 %v548, %v585
    %587 = vst [vmem:[#allocation2] sm:$0x1] %v586
    // Predicated region
    $region14: #{tpu_custom_call.1} parent=1 // pred_check
      %p588 = pneg %p12
    $region15: #{tpu_custom_call.1} parent=1 // pred_check_branch
      %590 = sbr.rel (%p588) target = $region17
    $region16: #{tpu_custom_call.1} parent=1 // pred_region
      %v591 = vld [vmem:[#allocation2] sm:$0x1]
      %v592 = vadd.f32 %v591, 1e-08
      %v593 = vrcp.pop %v592
      %v594 = vld [vmem:[#allocation3] sm:$0xff]
      %v595 = vld [vmem:[#allocation3 + $0x8] sm:$0xff]
      %v596 = vld [vmem:[#allocation3 + $0x10] sm:$0xff]
      %v597 = vld [vmem:[#allocation3 + $0x18] sm:$0xff]
      %v598 = vld [vmem:[#allocation3 + $0x20] sm:$0xff]
      %v599 = vld [vmem:[#allocation3 + $0x28] sm:$0xff]
      %v600 = vld [vmem:[#allocation3 + $0x30] sm:$0xff]
      %v601 = vld [vmem:[#allocation3 + $0x38] sm:$0xff]
      %v602 = vld [vmem:[#allocation3 + $0x40] sm:$0xff]
      %v603 = vld [vmem:[#allocation3 + $0x48] sm:$0xff]
      %v604 = vld [vmem:[#allocation3 + $0x50] sm:$0xff]
      %v605 = vld [vmem:[#allocation3 + $0x58] sm:$0xff]
      %v606 = vld [vmem:[#allocation3 + $0x60] sm:$0xff]
      %v607 = vld [vmem:[#allocation3 + $0x68] sm:$0xff]
      %v608 = vld [vmem:[#allocation3 + $0x70] sm:$0xff]
      %v609 = vld [vmem:[#allocation3 + $0x78] sm:$0xff]
      %610 = vxpose.xlu0.b32.start [1/16] %v593, 128
      %611 = vxpose.xlu0.b32.cont [2/16] 0.0, 128
      %612 = vxpose.xlu0.b32.cont [3/16] 0.0, 128
      %613 = vxpose.xlu0.b32.cont [4/16] 0.0, 128
      %614 = vxpose.xlu0.b32.cont [5/16] 0.0, 128
      %615 = vxpose.xlu0.b32.cont [6/16] 0.0, 128
      %616 = vxpose.xlu0.b32.cont [7/16] 0.0, 128
      %617 = vxpose.xlu0.b32.cont [8/16] 0.0, 128
      %618 = vxpose.xlu0.b32.cont [9/16] 0.0, 128
      %619 = vxpose.xlu0.b32.cont [10/16] 0.0, 128
      %620 = vxpose.xlu0.b32.cont [11/16] 0.0, 128
      %621 = vxpose.xlu0.b32.cont [12/16] 0.0, 128
      %622 = vxpose.xlu0.b32.cont [13/16] 0.0, 128
      %623 = vxpose.xlu0.b32.cont [14/16] 0.0, 128
      %624 = vxpose.xlu0.b32.cont [15/16] 0.0, 128
      %625 = vxpose.xlu0.b32.end [16/16] 0.0, 128
      %v626 = vpop.trf.xlu0
      %v627 = vpop.trf.xlu0
      %v628 = vpop.trf.xlu0
      %v629 = vpop.trf.xlu0
      %v630 = vpop.trf.xlu0
      %v631 = vpop.trf.xlu0
      %v632 = vpop.trf.xlu0
      %v633 = vpop.trf.xlu0
      %v634 = vpop.trf.xlu0
      %v635 = vpop.trf.xlu0
      %v636 = vpop.trf.xlu0
      %v637 = vpop.trf.xlu0
      %v638 = vpop.trf.xlu0
      %v639 = vpop.trf.xlu0
      %v640 = vpop.trf.xlu0
      %v641 = vpop.trf.xlu0
      %643 = vset.pattern.permute.xlu0 0
      %644 = vperm.xlu0 %643, %v626
      %v645 = vpop.permute.xlu0 %644
      %648 = vset.pattern.permute.xlu0 0
      %649 = vperm.xlu0 %648, %v627
      %v650 = vpop.permute.xlu0 %649
      %653 = vset.pattern.permute.xlu0 0
      %654 = vperm.xlu0 %653, %v628
      %v655 = vpop.permute.xlu0 %654
      %658 = vset.pattern.permute.xlu0 0
      %659 = vperm.xlu0 %658, %v629
      %v660 = vpop.permute.xlu0 %659
      %663 = vset.pattern.permute.xlu0 0
      %664 = vperm.xlu0 %663, %v630
      %v665 = vpop.permute.xlu0 %664
      %668 = vset.pattern.permute.xlu0 0
      %669 = vperm.xlu0 %668, %v631
      %v670 = vpop.permute.xlu0 %669
      %673 = vset.pattern.permute.xlu0 0
      %674 = vperm.xlu0 %673, %v632
      %v675 = vpop.permute.xlu0 %674
      %678 = vset.pattern.permute.xlu0 0
      %679 = vperm.xlu0 %678, %v633
      %v680 = vpop.permute.xlu0 %679
      %683 = vset.pattern.permute.xlu0 0
      %684 = vperm.xlu0 %683, %v634
      %v685 = vpop.permute.xlu0 %684
      %688 = vset.pattern.permute.xlu0 0
      %689 = vperm.xlu0 %688, %v635
      %v690 = vpop.permute.xlu0 %689
      %693 = vset.pattern.permute.xlu0 0
      %694 = vperm.xlu0 %693, %v636
      %v695 = vpop.permute.xlu0 %694
      %698 = vset.pattern.permute.xlu0 0
      %699 = vperm.xlu0 %698, %v637
      %v700 = vpop.permute.xlu0 %699
      %703 = vset.pattern.permute.xlu0 0
      %704 = vperm.xlu0 %703, %v638
      %v705 = vpop.permute.xlu0 %704
      %708 = vset.pattern.permute.xlu0 0
      %709 = vperm.xlu0 %708, %v639
      %v710 = vpop.permute.xlu0 %709
      %713 = vset.pattern.permute.xlu0 0
      %714 = vperm.xlu0 %713, %v640
      %v715 = vpop.permute.xlu0 %714
      %718 = vset.pattern.permute.xlu0 0
      %719 = vperm.xlu0 %718, %v641
      %v720 = vpop.permute.xlu0 %719
      %v722 = vmul.f32 %v594, %v645
      %v723 = vmul.f32 %v595, %v650
      %v724 = vmul.f32 %v596, %v655
      %v725 = vmul.f32 %v597, %v660
      %v726 = vmul.f32 %v598, %v665
      %v727 = vmul.f32 %v599, %v670
      %v728 = vmul.f32 %v600, %v675
      %v729 = vmul.f32 %v601, %v680
      %v730 = vmul.f32 %v602, %v685
      %v731 = vmul.f32 %v603, %v690
      %v732 = vmul.f32 %v604, %v695
      %v733 = vmul.f32 %v605, %v700
      %v734 = vmul.f32 %v606, %v705
      %v735 = vmul.f32 %v607, %v710
      %v736 = vmul.f32 %v608, %v715
      %v737 = vmul.f32 %v609, %v720
      %738 = vst [vmem:[#allocation3] sm:$0xff] %v722
      %739 = vst [vmem:[#allocation3 + $0x8] sm:$0xff] %v723
      %740 = vst [vmem:[#allocation3 + $0x10] sm:$0xff] %v724
      %741 = vst [vmem:[#allocation3 + $0x18] sm:$0xff] %v725
      %742 = vst [vmem:[#allocation3 + $0x20] sm:$0xff] %v726
      %743 = vst [vmem:[#allocation3 + $0x28] sm:$0xff] %v727
      %744 = vst [vmem:[#allocation3 + $0x30] sm:$0xff] %v728
      %745 = vst [vmem:[#allocation3 + $0x38] sm:$0xff] %v729
      %746 = vst [vmem:[#allocation3 + $0x40] sm:$0xff] %v730
      %747 = vst [vmem:[#allocation3 + $0x48] sm:$0xff] %v731
      %748 = vst [vmem:[#allocation3 + $0x50] sm:$0xff] %v732
      %749 = vst [vmem:[#allocation3 + $0x58] sm:$0xff] %v733
      %750 = vst [vmem:[#allocation3 + $0x60] sm:$0xff] %v734
      %751 = vst [vmem:[#allocation3 + $0x68] sm:$0xff] %v735
      %752 = vst [vmem:[#allocation3 + $0x70] sm:$0xff] %v736
      %753 = vst [vmem:[#allocation3 + $0x78] sm:$0xff] %v737
    $region17: #{tpu_custom_call.1} parent=1 // pred_fallthru
      _
    // Predicated region
    $region18: #{tpu_custom_call.1} parent=1 // pred_check
      _
    $region19: #{tpu_custom_call.1} parent=1 // pred_check_branch
      %755 = sbr.rel (0) target = $region21
    $region20: #{tpu_custom_call.1} parent=1 // pred_region
      %s757 = ssub.s32 2048, 2048
      %758 = vsyncadd [#allocation4], %s757
      %s759 = sshll.u32 [#allocation3], 4
      %s760 = int_to_ptr.vmem [resolvable:$true] %s759
      %765 = dma.vmem_to_hbm [thread:$0]  %s760, 2048, %s2, [#allocation4], 128, 128, 8
    $region21: #{tpu_custom_call.1} parent=1 // pred_fallthru
      _
    // Predicated region
    $region22: #{tpu_custom_call.1} parent=1 // pred_check
      _
    $region23: #{tpu_custom_call.1} parent=1 // pred_check_branch
      %767 = sbr.rel (0) target = $region25
    $region24: #{tpu_custom_call.1} parent=1 // pred_region
      %768 = dma.done [#allocation4], 2048
    $region25: #{tpu_custom_call.1} parent=1 // pred_fallthru
      _
    %769 = vsyncpa [#allocation4], 1

</llo_original>
